<compile_context>
chip_gen: v6e
topology: v6e:2x2x1
jax: 0.10.0
libtpu: 0.0.40
codegen_flags: <defaults>
</compile_context>

<pallas_src>
import functools

import jax
import jax.numpy as jnp
from jax.experimental import pallas as pl
from jax.experimental.pallas import tpu as pltpu


def _mlp_kernel(x_ref, w1t_ref, b1_ref, w2_ref, b2_ref, y_ref):
    """One batch tile in natural layout.

    x_ref:  (tile_n, d_in)    input rows (f32 or bf16)
    w1t_ref:(d_in, h_pad)     fc1 weight, pre-transposed, hidden padded to 128
    b1_ref: (1, h_pad) f32    fc1 bias row
    w2_ref: (h_pad, 128) f32  fc2 weight column 0, columns 1..127 zero (MXU tile)
    b2_ref: (1,) SMEM f32     fc2 bias scalar
    y_ref:  (tile_n, 1) f32   sigmoid output
    """
    # fc1 on the MXU: (tile_n, d_in) @ (d_in, h_pad) -> (tile_n, h_pad), f32 acc.
    # In-kernel cast to the MXU dtype (bf16 by default): VPU op, no extra HBM pass.
    xk = x_ref[...].astype(w1t_ref.dtype)
    h = jnp.dot(xk, w1t_ref[...], preferred_element_type=jnp.float32)
    h = jnp.maximum(h + b1_ref[...], 0.0)                      # bias + relu on VPU, f32

    # fc2 on the (otherwise idle) MXU instead of a VALU multiply + XLU reduce:
    # w2 is a full (h_pad, 128) tile with only column 0 nonzero, so this is a
    # standard full-tile matmul; take column 0 of the result.
    # TODO(synk): output_dim > 1 would pack real columns into w2_ref here; the
    # LaNAS predictor always uses output_dim == 1.
    h2 = jnp.dot(h, w2_ref[...], preferred_element_type=jnp.float32)  # (tile_n, 128)
    logits = h2[:, 0:1] + b2_ref[0]                                    # (tile_n, 1)
    y_ref[...] = jax.nn.sigmoid(logits).astype(y_ref.dtype)


def _default_num_cores():
    """Best-effort TensorCore count per device (2 on v7x, 1 on v5e/v6e)."""
    try:
        dev = jax.devices()[0]
        if dev.platform != "tpu":
            return 1
        n = getattr(dev, "num_cores", None) or getattr(dev, "core_count", None)
        return max(1, int(n)) if n else 1
    except Exception:  # pragma: no cover - defensive
        return 1


def _auto_tile(batch, num_cores):
    """Pick tile_n so the grid has as few (and as balanced) steps as possible."""
    max_tile = 4096                      # VMEM is nowhere near the limit at this size
    num_tiles = max(num_cores, pl.cdiv(batch, max_tile))
    # Balanced across TensorCores on multi-TC parts (v7x); no-op for 1 TC.
    num_tiles = ((num_tiles + num_cores - 1) // num_cores) * num_cores
    tile = ((pl.cdiv(batch, num_tiles) + 127) // 128) * 128
    return max(tile, 128)


def prepare_params(w1, b1, w2, b2, *, use_bf16=True):
    """One-time parameter preprocessing (hoisted out of the per-call forward).

    w1: (100, d_in) fc1.weight (PyTorch (out, in) layout)
    b1: (100,)      fc1.bias
    w2: (1, 100)    fc2.weight
    b2: (1,)        fc2.bias
    Returns (w1t, b1_row, w2_tile, b2_scalar) ready for linear_model_apply.
    """
    hidden, d_in = w1.shape
    d_out = w2.shape[0]
    assert d_out == 1, "LaNAS LinearModel is used with output_dim == 1"

    h_pad = ((hidden + 127) // 128) * 128          # 100 -> 128 (full lane group)
    mxu_dtype = jnp.bfloat16 if use_bf16 else jnp.float32

    # Padded rows/cols contribute relu(0)*0 -> numerically identical to the
    # unpadded model.
    w1t = jnp.zeros((d_in, h_pad), mxu_dtype).at[:, :hidden].set(
        w1.T.astype(mxu_dtype))
    b1_row = jnp.zeros((1, h_pad), jnp.float32).at[0, :hidden].set(
        b1.astype(jnp.float32))
    # fc2 weight as a full MXU tile (only column 0 nonzero) so the epilogue is
    # a plain full-tile matmul on the idle MXU instead of VALU work.
    w2_tile = jnp.zeros((h_pad, 128), jnp.float32).at[:hidden, 0].set(
        w2[0].astype(jnp.float32))
    b2_scalar = b2.reshape(1).astype(jnp.float32)
    return (w1t, b1_row, w2_tile, b2_scalar)


@functools.partial(jax.jit, static_argnames=("tile_n", "num_cores"))
def linear_model_apply(params, x, *, tile_n=None, num_cores=None):
    """LinearModel.forward for a whole batch in a single pallas_call.

    params: output of prepare_params (computed once at parameter load).
    x     : (B, d_in) float32 (or bfloat16 to halve the streamed HBM bytes).
    returns (B, 1) float32.
    """
    w1t, b1_row, w2_tile, b2_scalar = params
    B, d_in = x.shape
    assert w1t.shape[0] == d_in
    h_pad = w1t.shape[1]

    if num_cores is None:
        num_cores = _default_num_cores()
    if tile_n is None:
        tile_n = _auto_tile(B, num_cores)
    assert tile_n % 8 == 0

    num_tiles = pl.cdiv(B, tile_n)
    b_pad = num_tiles * tile_n

    # Only host-side op that touches x: a single fused pad of the batch tail
    # (skipped entirely when B is already a multiple of tile_n).  Padded rows
    # compute sigmoid(relu(b1)·w2 + b2) — finite garbage sliced off below.
    x_in = x if b_pad == B else jnp.pad(x, ((0, b_pad - B), (0, 0)))

    y = pl.pallas_call(
        _mlp_kernel,
        out_shape=jax.ShapeDtypeStruct((b_pad, 1), jnp.float32),
        grid_spec=pltpu.PrefetchScalarGridSpec(
            num_scalar_prefetch=0,
            grid=(num_tiles,),
            in_specs=[
                pl.BlockSpec((tile_n, d_in), lambda i: (i, 0)),      # x streams
                pl.BlockSpec((d_in, h_pad), lambda i: (0, 0)),       # w1^T resident
                pl.BlockSpec((1, h_pad), lambda i: (0, 0)),          # b1 resident
                pl.BlockSpec((h_pad, 128), lambda i: (0, 0)),        # w2 tile resident
                pl.BlockSpec(memory_space=pltpu.MemorySpace.SMEM),   # b2 scalar
            ],
            out_specs=pl.BlockSpec((tile_n, 1), lambda i: (i, 0)),
        ),
        compiler_params=pltpu.CompilerParams(
            dimension_semantics=("parallel",),   # shard batch tiles across TCs (v7x)
        ),
    )(x_in, w1t, b1_row, w2_tile, b2_scalar)

    return y[:B]


def linear_model_forward(x, w1, b1, w2, b2, *, use_bf16=True, tile_n=None):
    """Convenience one-shot wrapper. For repeated calls, call prepare_params
    once and reuse linear_model_apply (avoids re-dispatching the weight prep)."""
    params = prepare_params(w1, b1, w2, b2, use_bf16=use_bf16)
    return linear_model_apply(params, x, tile_n=tile_n)


def xavier_uniform(key, out_features, in_features):
    # Matches torch.nn.init.xavier_uniform_ on a (out, in) weight matrix.
    limit = jnp.sqrt(6.0 / (in_features + out_features))
    return jax.random.uniform(
        key, (out_features, in_features), jnp.float32, minval=-limit, maxval=limit)


if __name__ == "__main__":
    input_dim = 32
    hidden = 100
    output_dim = 1
    batch = 300   # small, non-128-aligned batch: exercises tail padding + masked stores

    key = jax.random.PRNGKey(0)
    k_x, k_w1, k_b1, k_w2, k_b2 = jax.random.split(key, 5)

    x = jax.random.normal(k_x, (batch, input_dim), jnp.float32)

    # Parameters (xavier_uniform weights, PyTorch-style uniform bias init).
    w1 = xavier_uniform(k_w1, hidden, input_dim)            # (100, 32)
    b1 = jax.random.uniform(
        k_b1, (hidden,), jnp.float32,
        minval=-1.0 / jnp.sqrt(input_dim), maxval=1.0 / jnp.sqrt(input_dim))
    w2 = xavier_uniform(k_w2, output_dim, hidden)           # (1, 100)
    b2 = jax.random.uniform(
        k_b2, (output_dim,), jnp.float32,
        minval=-1.0 / jnp.sqrt(hidden), maxval=1.0 / jnp.sqrt(hidden))

    # Weight prep hoisted out of the forward path (runs once).
    params = prepare_params(w1, b1, w2, b2, use_bf16=True)

    y = linear_model_apply(params, x)
    y = jax.block_until_ready(y)

    hp = jax.lax.Precision.HIGHEST
    # Reference matching the kernel's numerics: bf16 fc1 operands, f32 accum,
    # f32 fc2 epilogue.
    h_bf = jnp.maximum(
        jnp.dot(x.astype(jnp.bfloat16), w1.T.astype(jnp.bfloat16),
                preferred_element_type=jnp.float32) + b1, 0.0)
    ref_bf = jax.nn.sigmoid(jnp.dot(h_bf, w2.T, precision=hp) + b2)
    # Full-f32 reference (loose sanity bound; gap is dominated by bf16 fc1 inputs).
    h_f32 = jnp.maximum(jnp.dot(x, w1.T, precision=hp) + b1, 0.0)
    ref_f32 = jax.nn.sigmoid(jnp.dot(h_f32, w2.T, precision=hp) + b2)

    assert y.shape == (batch, output_dim)
    assert jnp.allclose(y, ref_bf, atol=5e-3), "mismatch vs bf16-matched reference"
    assert jnp.allclose(y, ref_f32, atol=5e-2), "mismatch vs f32 reference"

    print("KERNEL_OK")
</pallas_src>

<mosaic_0001>
module attributes {stable_mosaic.version = 11 : i64} {
  func.func @_mlp_kernel(%arg0: i32, %arg1: memref<384x32xf32, #tpu.memory_space<vmem>>, %arg2: memref<32x128xbf16, #tpu.memory_space<vmem>>, %arg3: memref<1x128xf32, #tpu.memory_space<vmem>>, %arg4: memref<128x128xf32, #tpu.memory_space<vmem>>, %arg5: memref<1xf32, #tpu.memory_space<smem>>, %arg6: memref<384x1xf32, #tpu.memory_space<vmem>>) attributes {dimension_semantics = [#tpu.dimension_semantics<parallel>], iteration_bounds = array<i64: 1>, scalar_prefetch = 0 : i64, scratch_operands = 0 : i64, tpu.core_type = #tpu.core_type<tc>, window_params = [{transform_indices = @transform_0, window_bounds = array<i64: 384, 32>}, {pipeline_mode = #tpu.pipeline_mode<synchronous>, transform_indices = @transform_1, window_bounds = array<i64: 32, 128>}, {pipeline_mode = #tpu.pipeline_mode<synchronous>, transform_indices = @transform_2, window_bounds = array<i64: 1, 128>}, {pipeline_mode = #tpu.pipeline_mode<synchronous>, transform_indices = @transform_3, window_bounds = array<i64: 128, 128>}, {transform_indices = @transform_4, window_bounds = array<i64: 1>}, {transform_indices = @transform_5, window_bounds = array<i64: 384, 1>}]} {
    %c0 = arith.constant 0 : index
    %c0_0 = arith.constant 0 : index
    %0 = vector.load %arg1[%c0, %c0_0] : memref<384x32xf32, #tpu.memory_space<vmem>>, vector<384x32xf32>
    %1 = arith.truncf %0 : vector<384x32xf32> to vector<384x32xbf16>
    %c0_1 = arith.constant 0 : index
    %c0_2 = arith.constant 0 : index
    %2 = vector.load %arg2[%c0_1, %c0_2] : memref<32x128xbf16, #tpu.memory_space<vmem>>, vector<32x128xbf16>
    %cst = arith.constant dense<0.000000e+00> : vector<384x128xf32>
    %3 = tpu.matmul %1, %2, %cst {dimension_numbers = #tpu.dot_dimension_numbers<[1], [0], [0], [1], [0, 0, 1, 1], [], []>} : vector<384x32xbf16>, vector<32x128xbf16>, vector<384x128xf32> -> vector<384x128xf32>
    %c0_3 = arith.constant 0 : index
    %c0_4 = arith.constant 0 : index
    %4 = vector.load %arg3[%c0_3, %c0_4] : memref<1x128xf32, #tpu.memory_space<vmem>>, vector<1x128xf32>
    %5 = vector.broadcast %4 : vector<1x128xf32> to vector<384x128xf32>
    %6 = arith.addf %3, %5 : vector<384x128xf32>
    %cst_5 = arith.constant 0.000000e+00 : f32
    %7 = vector.broadcast %cst_5 : f32 to vector<384x128xf32>
    %8 = arith.maximumf %6, %7 : vector<384x128xf32>
    %c0_6 = arith.constant 0 : index
    %c0_7 = arith.constant 0 : index
    %9 = vector.load %arg4[%c0_6, %c0_7] : memref<128x128xf32, #tpu.memory_space<vmem>>, vector<128x128xf32>
    %cst_8 = arith.constant dense<0.000000e+00> : vector<384x128xf32>
    %10 = tpu.matmul %8, %9, %cst_8 {dimension_numbers = #tpu.dot_dimension_numbers<[1], [0], [0], [1], [0, 0, 1, 1], [], []>} : vector<384x128xf32>, vector<128x128xf32>, vector<384x128xf32> -> vector<384x128xf32>
    %11 = vector.extract_strided_slice %10 {offsets = [0, 0], sizes = [384, 1], strides = [1, 1]} : vector<384x128xf32> to vector<384x1xf32>
    %c0_9 = arith.constant 0 : index
    %12 = memref.load %arg5[%c0_9] : memref<1xf32, #tpu.memory_space<smem>>
    %13 = vector.broadcast %12 : f32 to vector<384x1xf32>
    %14 = arith.addf %11, %13 : vector<384x1xf32>
    %15 = arith.negf %14 : vector<384x1xf32>
    %16 = math.exp %15 : vector<384x1xf32>
    %cst_10 = arith.constant 1.000000e+00 : f32
    %17 = vector.broadcast %cst_10 : f32 to vector<384x1xf32>
    %18 = arith.addf %17, %16 : vector<384x1xf32>
    %19 = arith.divf %17, %18 : vector<384x1xf32>
    %c0_11 = arith.constant 0 : index
    %c0_12 = arith.constant 0 : index
    %20 = vector.load %arg6[%c0_11, %c0_12] : memref<384x1xf32, #tpu.memory_space<vmem>>, vector<384x1xf32>
    tpu.vector_store %arg6[%c0_11, %c0_12], %19 {strides = array<i32>} : memref<384x1xf32, #tpu.memory_space<vmem>>, vector<384x1xf32>,
    return
  }
  func.func @transform_0(%arg0: i32) -> (i32, i32) {
    %c0_i32 = arith.constant 0 : i32
    %c0_i32_0 = arith.constant 0 : i32
    return %arg0, %c0_i32 : i32, i32
  }
  func.func @transform_1(%arg0: i32) -> (i32, i32) {
    %c0_i32 = arith.constant 0 : i32
    %c0_i32_0 = arith.constant 0 : i32
    %c0_i32_1 = arith.constant 0 : i32
    return %c0_i32, %c0_i32_0 : i32, i32
  }
  func.func @transform_2(%arg0: i32) -> (i32, i32) {
    %c0_i32 = arith.constant 0 : i32
    %c0_i32_0 = arith.constant 0 : i32
    %c0_i32_1 = arith.constant 0 : i32
    return %c0_i32, %c0_i32_0 : i32, i32
  }
  func.func @transform_3(%arg0: i32) -> (i32, i32) {
    %c0_i32 = arith.constant 0 : i32
    %c0_i32_0 = arith.constant 0 : i32
    %c0_i32_1 = arith.constant 0 : i32
    return %c0_i32, %c0_i32_0 : i32, i32
  }
  func.func @transform_4(%arg0: i32) -> i32 {
    %c0_i32 = arith.constant 0 : i32
    %c0_i32_0 = arith.constant 0 : i32
    return %c0_i32 : i32
  }
  func.func @transform_5(%arg0: i32) -> (i32, i32) {
    %c0_i32 = arith.constant 0 : i32
    %c0_i32_0 = arith.constant 0 : i32
    return %arg0, %c0_i32 : i32, i32
  }
}

</mosaic_0001>

<llo_original>
// kernel: linear_model_apply.1
$region0: #{linear_model_apply.1}
  #allocation0 [shape = 'u32[]', space=smem, size = 0x4, offset = 0x4, fixed_abs, tag = 'smem constant byte address 0x4 - core index']
  #allocation1 [shape = 'u32[144,128]{1,0:T(1,128)}', space=vmem, size = 0x12000, scoped, tag = 'internal scratch']
  #allocation2 [shape = 'f32[1]{0:T(128)S(6)}', space=smem, size = 0x200, scoped, tag = 'scoped memory for linear_model_apply.1']
  %s0 = inlined_call_operand.vmem [shape: f32[384,32], index: 0, kind: input, shape index: {}]
  %s1 = inlined_call_operand.vmem [shape: bf16[32,128], index: 1, kind: input, shape index: {}]
  %s2 = inlined_call_operand.vmem [shape: f32[1,128], index: 2, kind: input, shape index: {}]
  %s3 = inlined_call_operand.vmem [shape: f32[128,128], index: 3, kind: input, shape index: {}]
  %s4 = inlined_call_operand.<no memory space> [shape: f32[1], index: 4, kind: input, shape index: {}]
  %s5 = inlined_call_operand.vmem [shape: f32[384,1], index: 5, kind: output, shape index: {}]
  %s6 = sld [smem:[#allocation0]]
  $region30: #{linear_model_apply.1} parent=0
    _
  %s8 = ssub.s32 1, %s6
  %s9 = scalar_select 0, %s8, %s6
  %10 = sst [smem:[#allocation2]] %s4
  // Predicated region
  $region2: #{linear_model_apply.1} parent=0 // pred_check
    _
  $region3: #{linear_model_apply.1} parent=0 // pred_check_branch
    %12 = sbr.rel (0) target = $region5
  $region4: #{linear_model_apply.1} parent=0 // pred_region
    _
  $region5: #{linear_model_apply.1} parent=0 // pred_fallthru
    _
  // Predicated region
  $region6: #{linear_model_apply.1} parent=0 // pred_check
    _
  $region7: #{linear_model_apply.1} parent=0 // pred_check_branch
    %14 = sbr.rel (0) target = $region9
  $region8: #{linear_model_apply.1} parent=0 // pred_region
    _
  $region9: #{linear_model_apply.1} parent=0 // pred_fallthru
    _
  // Predicated region
  $region10: #{linear_model_apply.1} parent=0 // pred_check
    _
  $region11: #{linear_model_apply.1} parent=0 // pred_check_branch
    %16 = sbr.rel (0) target = $region13
  $region12: #{linear_model_apply.1} parent=0 // pred_region
    _
  $region13: #{linear_model_apply.1} parent=0 // pred_fallthru
    _
  // Predicated region
  $region14: #{linear_model_apply.1} parent=0 // pred_check
    _
  $region15: #{linear_model_apply.1} parent=0 // pred_check_branch
    %18 = sbr.rel (0) target = $region17
  $region16: #{linear_model_apply.1} parent=0 // pred_region
    _
  $region17: #{linear_model_apply.1} parent=0 // pred_fallthru
    _
  // Predicated region
  $region18: #{linear_model_apply.1} parent=0 // pred_check
    _
  $region19: #{linear_model_apply.1} parent=0 // pred_check_branch
    %20 = sbr.rel (0) target = $region21
  $region20: #{linear_model_apply.1} parent=0 // pred_region
    _
  $region21: #{linear_model_apply.1} parent=0 // pred_fallthru
    _
  %v22 = vld [vmem:[%s0] sm:$0xff]
  %v23 = vld [vmem:[%s0 + $0x8] sm:$0xff]
  %v24 = vld [vmem:[%s0 + $0x10] sm:$0xff]
  %v25 = vld [vmem:[%s0 + $0x18] sm:$0xff]
  %v26 = vld [vmem:[%s0 + $0x20] sm:$0xff]
  %v27 = vld [vmem:[%s0 + $0x28] sm:$0xff]
  %v28 = vld [vmem:[%s0 + $0x30] sm:$0xff]
  %v29 = vld [vmem:[%s0 + $0x38] sm:$0xff]
  %v30 = vld [vmem:[%s0 + $0x40] sm:$0xff]
  %v31 = vld [vmem:[%s0 + $0x48] sm:$0xff]
  %v32 = vld [vmem:[%s0 + $0x50] sm:$0xff]
  %v33 = vld [vmem:[%s0 + $0x58] sm:$0xff]
  %v34 = vld [vmem:[%s0 + $0x60] sm:$0xff]
  %v35 = vld [vmem:[%s0 + $0x68] sm:$0xff]
  %v36 = vld [vmem:[%s0 + $0x70] sm:$0xff]
  %v37 = vld [vmem:[%s0 + $0x78] sm:$0xff]
  %v38 = vld [vmem:[%s0 + $0x80] sm:$0xff]
  %v39 = vld [vmem:[%s0 + $0x88] sm:$0xff]
  %v40 = vld [vmem:[%s0 + $0x90] sm:$0xff]
  %v41 = vld [vmem:[%s0 + $0x98] sm:$0xff]
  %v42 = vld [vmem:[%s0 + $0xa0] sm:$0xff]
  %v43 = vld [vmem:[%s0 + $0xa8] sm:$0xff]
  %v44 = vld [vmem:[%s0 + $0xb0] sm:$0xff]
  %v45 = vld [vmem:[%s0 + $0xb8] sm:$0xff]
  %v46 = vld [vmem:[%s0 + $0xc0] sm:$0xff]
  %v47 = vld [vmem:[%s0 + $0xc8] sm:$0xff]
  %v48 = vld [vmem:[%s0 + $0xd0] sm:$0xff]
  %v49 = vld [vmem:[%s0 + $0xd8] sm:$0xff]
  %v50 = vld [vmem:[%s0 + $0xe0] sm:$0xff]
  %v51 = vld [vmem:[%s0 + $0xe8] sm:$0xff]
  %v52 = vld [vmem:[%s0 + $0xf0] sm:$0xff]
  %v53 = vld [vmem:[%s0 + $0xf8] sm:$0xff]
  %v54 = vld [vmem:[%s0 + $0x100] sm:$0xff]
  %v55 = vld [vmem:[%s0 + $0x108] sm:$0xff]
  %v56 = vld [vmem:[%s0 + $0x110] sm:$0xff]
  %v57 = vld [vmem:[%s0 + $0x118] sm:$0xff]
  %v58 = vld [vmem:[%s0 + $0x120] sm:$0xff]
  %v59 = vld [vmem:[%s0 + $0x128] sm:$0xff]
  %v60 = vld [vmem:[%s0 + $0x130] sm:$0xff]
  %v61 = vld [vmem:[%s0 + $0x138] sm:$0xff]
  %v62 = vld [vmem:[%s0 + $0x140] sm:$0xff]
  %v63 = vld [vmem:[%s0 + $0x148] sm:$0xff]
  %v64 = vld [vmem:[%s0 + $0x150] sm:$0xff]
  %v65 = vld [vmem:[%s0 + $0x158] sm:$0xff]
  %v66 = vld [vmem:[%s0 + $0x160] sm:$0xff]
  %v67 = vld [vmem:[%s0 + $0x168] sm:$0xff]
  %v68 = vld [vmem:[%s0 + $0x170] sm:$0xff]
  %v69 = vld [vmem:[%s0 + $0x178] sm:$0xff]
  %v70 = vpack.c.bf16 %v23, %v22
  %v71 = vpack.c.bf16 %v25, %v24
  %v72 = vpack.c.bf16 %v27, %v26
  %v73 = vpack.c.bf16 %v29, %v28
  %v74 = vpack.c.bf16 %v31, %v30
  %v75 = vpack.c.bf16 %v33, %v32
  %v76 = vpack.c.bf16 %v35, %v34
  %v77 = vpack.c.bf16 %v37, %v36
  %v78 = vpack.c.bf16 %v39, %v38
  %v79 = vpack.c.bf16 %v41, %v40
  %v80 = vpack.c.bf16 %v43, %v42
  %v81 = vpack.c.bf16 %v45, %v44
  %v82 = vpack.c.bf16 %v47, %v46
  %v83 = vpack.c.bf16 %v49, %v48
  %v84 = vpack.c.bf16 %v51, %v50
  %v85 = vpack.c.bf16 %v53, %v52
  %v86 = vpack.c.bf16 %v55, %v54
  %v87 = vpack.c.bf16 %v57, %v56
  %v88 = vpack.c.bf16 %v59, %v58
  %v89 = vpack.c.bf16 %v61, %v60
  %v90 = vpack.c.bf16 %v63, %v62
  %v91 = vpack.c.bf16 %v65, %v64
  %v92 = vpack.c.bf16 %v67, %v66
  %v93 = vpack.c.bf16 %v69, %v68
  %v94 = vld [vmem:[%s1] sm:$0xf]
  %v95 = vld [vmem:[%s1 + $0x4] sm:$0xf]
  %v96 = vld [vmem:[%s1 + $0x8] sm:$0xf]
  %v97 = vld [vmem:[%s1 + $0xc] sm:$0xf]
  %v98 = vld [vmem:[%s2] sm:$0x1]
  %v100 = vlaneseq
  %v101 = vshrl.u32 %v100, 7
  %v102 = vsub.s32 0, %v101
  %v103 = vrot.slane %v98, %v102
  %v109 = vunpack.c.l.b16 %v94
  %v110 = vunpack.c.l.b16 %v95
  %v111 = vunpack.c.l.b16 %v96
  %v112 = vunpack.c.l.b16 %v97
  %v113 = vpack.c.b16 %v110, %v109
  %v114 = vpack.c.b16 %v112, %v111
  %vm117 = vcmask 261120
  %v119 = vsel %vm117, %v70, 0
  %v122 = vsel %vm117, %v71, 0
  %v125 = vsel %vm117, %v72, 0
  %v128 = vsel %vm117, %v73, 0
  %v131 = vsel %vm117, %v74, 0
  %v134 = vsel %vm117, %v75, 0
  %v137 = vsel %vm117, %v76, 0
  %v140 = vsel %vm117, %v77, 0
  %v143 = vsel %vm117, %v78, 0
  %v146 = vsel %vm117, %v79, 0
  %v149 = vsel %vm117, %v80, 0
  %v152 = vsel %vm117, %v81, 0
  %v155 = vsel %vm117, %v82, 0
  %v158 = vsel %vm117, %v83, 0
  %v161 = vsel %vm117, %v84, 0
  %v164 = vsel %vm117, %v85, 0
  %v167 = vsel %vm117, %v86, 0
  %v170 = vsel %vm117, %v87, 0
  %v173 = vsel %vm117, %v88, 0
  %v176 = vsel %vm117, %v89, 0
  %v179 = vsel %vm117, %v90, 0
  %v182 = vsel %vm117, %v91, 0
  %v185 = vsel %vm117, %v92, 0
  %v188 = vsel %vm117, %v93, 0
  %190 = vmatprep.subr.bf16.mxu0 0
  %191 = vmatpush1.bf16.msra.mxu0 0
  %192 = vmatprep.subr.bf16.mxu0 0
  %193 = vmatpush1.bf16.msra.mxu0 0
  %194 = vmatprep.subr.bf16.mxu0 0
  %195 = vmatpush1.bf16.msra.mxu0 0
  %196 = vmatprep.subr.bf16.mxu0 0
  %197 = vmatpush1.bf16.msra.mxu0 0
  %198 = vmatprep.subr.bf16.mxu0 0
  %199 = vmatpush1.bf16.msra.mxu0 0
  %200 = vmatprep.subr.bf16.mxu0 0
  %201 = vmatpush1.bf16.msra.mxu0 0
  %202 = vmatprep.subr.bf16.mxu0 0
  %203 = vmatpush1.bf16.msra.mxu0 %v114
  %204 = vmatprep.subr.bf16.mxu0 0
  %205 = vmatpush1.bf16.msra.mxu0 %v113
  %206 = vmatprep.subr.bf16.mxu0 0
  %207 = vmatpush2.bf16.msra.mxu0 0
  %208 = vmatprep.subr.bf16.mxu0 0
  %209 = vmatpush2.bf16.msra.mxu0 0
  %210 = vmatprep.subr.bf16.mxu0 0
  %211 = vmatpush2.bf16.msra.mxu0 0
  %212 = vmatprep.subr.bf16.mxu0 0
  %213 = vmatpush2.bf16.msra.mxu0 0
  %214 = vmatprep.subr.bf16.mxu0 0
  %215 = vmatpush2.bf16.msra.mxu0 0
  %216 = vmatprep.subr.bf16.mxu0 0
  %217 = vmatpush2.bf16.msra.mxu0 0
  %218 = vmatprep.subr.bf16.mxu0 0
  %219 = vmatpush2.bf16.msra.mxu0 0
  %220 = vmatprep.subr.bf16.mxu0 0
  %221 = vmatpush2.bf16.msra.mxu0 0
  %222 = vmatprep.mubr.bf16.mxu0 0
  %223 = vmatmul.mubr.bf16.gmra.mxu0 %v119
  %v224 = vpop.f32.mrf.mxu0
  %v225 = vadd.f32 %v103, %v224
  %v226 = vpop.f32.mrf.mxu0
  %v227 = vpop.f32.mrf.mxu0
  %v228 = vadd.f32 %v103, %v227
  %v229 = vpop.f32.mrf.mxu0
  %230 = vmatprep.mubr.bf16.mxu0 0
  %231 = vmatmul.mubr.bf16.gmra.mxu0 %v122
  %v232 = vpop.f32.mrf.mxu0
  %v233 = vadd.f32 %v103, %v232
  %v234 = vpop.f32.mrf.mxu0
  %v235 = vpop.f32.mrf.mxu0
  %v236 = vadd.f32 %v103, %v235
  %v237 = vpop.f32.mrf.mxu0
  %238 = vmatprep.mubr.bf16.mxu0 0
  %239 = vmatmul.mubr.bf16.gmra.mxu0 %v125
  %v240 = vpop.f32.mrf.mxu0
  %v241 = vadd.f32 %v103, %v240
  %v242 = vpop.f32.mrf.mxu0
  %v243 = vpop.f32.mrf.mxu0
  %v244 = vadd.f32 %v103, %v243
  %v245 = vpop.f32.mrf.mxu0
  %246 = vmatprep.mubr.bf16.mxu0 0
  %247 = vmatmul.mubr.bf16.gmra.mxu0 %v128
  %v248 = vpop.f32.mrf.mxu0
  %v249 = vadd.f32 %v103, %v248
  %v250 = vpop.f32.mrf.mxu0
  %v251 = vpop.f32.mrf.mxu0
  %v252 = vadd.f32 %v103, %v251
  %v253 = vpop.f32.mrf.mxu0
  %254 = vmatprep.mubr.bf16.mxu0 0
  %255 = vmatmul.mubr.bf16.gmra.mxu0 %v131
  %v256 = vpop.f32.mrf.mxu0
  %v257 = vadd.f32 %v103, %v256
  %v258 = vpop.f32.mrf.mxu0
  %v259 = vpop.f32.mrf.mxu0
  %v260 = vadd.f32 %v103, %v259
  %v261 = vpop.f32.mrf.mxu0
  %262 = vmatprep.mubr.bf16.mxu0 0
  %263 = vmatmul.mubr.bf16.gmra.mxu0 %v134
  %v264 = vpop.f32.mrf.mxu0
  %v265 = vadd.f32 %v103, %v264
  %v266 = vpop.f32.mrf.mxu0
  %v267 = vpop.f32.mrf.mxu0
  %v268 = vadd.f32 %v103, %v267
  %v269 = vpop.f32.mrf.mxu0
  %270 = vmatprep.mubr.bf16.mxu0 0
  %271 = vmatmul.mubr.bf16.gmra.mxu0 %v137
  %v272 = vpop.f32.mrf.mxu0
  %v273 = vadd.f32 %v103, %v272
  %v274 = vpop.f32.mrf.mxu0
  %v275 = vpop.f32.mrf.mxu0
  %v276 = vadd.f32 %v103, %v275
  %v277 = vpop.f32.mrf.mxu0
  %278 = vmatprep.mubr.bf16.mxu0 0
  %279 = vmatmul.mubr.bf16.gmra.mxu0 %v140
  %v280 = vpop.f32.mrf.mxu0
  %v281 = vadd.f32 %v103, %v280
  %v282 = vpop.f32.mrf.mxu0
  %v283 = vpop.f32.mrf.mxu0
  %v284 = vadd.f32 %v103, %v283
  %v285 = vpop.f32.mrf.mxu0
  %286 = vmatprep.mubr.bf16.mxu0 0
  %287 = vmatmul.mubr.bf16.gmra.mxu0 %v143
  %v288 = vpop.f32.mrf.mxu0
  %v289 = vadd.f32 %v103, %v288
  %v290 = vpop.f32.mrf.mxu0
  %v291 = vpop.f32.mrf.mxu0
  %v292 = vadd.f32 %v103, %v291
  %v293 = vpop.f32.mrf.mxu0
  %294 = vmatprep.mubr.bf16.mxu0 0
  %295 = vmatmul.mubr.bf16.gmra.mxu0 %v146
  %v296 = vpop.f32.mrf.mxu0
  %v297 = vadd.f32 %v103, %v296
  %v298 = vpop.f32.mrf.mxu0
  %v299 = vpop.f32.mrf.mxu0
  %v300 = vadd.f32 %v103, %v299
  %v301 = vpop.f32.mrf.mxu0
  %302 = vmatprep.mubr.bf16.mxu0 0
  %303 = vmatmul.mubr.bf16.gmra.mxu0 %v149
  %v304 = vpop.f32.mrf.mxu0
  %v305 = vadd.f32 %v103, %v304
  %v306 = vpop.f32.mrf.mxu0
  %v307 = vpop.f32.mrf.mxu0
  %v308 = vadd.f32 %v103, %v307
  %v309 = vpop.f32.mrf.mxu0
  %310 = vmatprep.mubr.bf16.mxu0 0
  %311 = vmatmul.mubr.bf16.gmra.mxu0 %v152
  %v312 = vpop.f32.mrf.mxu0
  %v313 = vadd.f32 %v103, %v312
  %v314 = vpop.f32.mrf.mxu0
  %v315 = vpop.f32.mrf.mxu0
  %v316 = vadd.f32 %v103, %v315
  %v317 = vpop.f32.mrf.mxu0
  %318 = vmatprep.mubr.bf16.mxu0 0
  %319 = vmatmul.mubr.bf16.gmra.mxu0 %v155
  %v320 = vpop.f32.mrf.mxu0
  %v321 = vadd.f32 %v103, %v320
  %v322 = vpop.f32.mrf.mxu0
  %v323 = vpop.f32.mrf.mxu0
  %v324 = vadd.f32 %v103, %v323
  %v325 = vpop.f32.mrf.mxu0
  %326 = vmatprep.mubr.bf16.mxu0 0
  %327 = vmatmul.mubr.bf16.gmra.mxu0 %v158
  %v328 = vpop.f32.mrf.mxu0
  %v329 = vadd.f32 %v103, %v328
  %v330 = vpop.f32.mrf.mxu0
  %v331 = vpop.f32.mrf.mxu0
  %v332 = vadd.f32 %v103, %v331
  %v333 = vpop.f32.mrf.mxu0
  %334 = vmatprep.mubr.bf16.mxu0 0
  %335 = vmatmul.mubr.bf16.gmra.mxu0 %v161
  %v336 = vpop.f32.mrf.mxu0
  %v337 = vadd.f32 %v103, %v336
  %v338 = vpop.f32.mrf.mxu0
  %v339 = vpop.f32.mrf.mxu0
  %v340 = vadd.f32 %v103, %v339
  %v341 = vpop.f32.mrf.mxu0
  %342 = vmatprep.mubr.bf16.mxu0 0
  %343 = vmatmul.mubr.bf16.gmra.mxu0 %v164
  %v344 = vpop.f32.mrf.mxu0
  %v345 = vadd.f32 %v103, %v344
  %v346 = vpop.f32.mrf.mxu0
  %v347 = vpop.f32.mrf.mxu0
  %v348 = vadd.f32 %v103, %v347
  %v349 = vpop.f32.mrf.mxu0
  %350 = vmatprep.mubr.bf16.mxu0 0
  %351 = vmatmul.mubr.bf16.gmra.mxu0 %v167
  %v352 = vpop.f32.mrf.mxu0
  %v353 = vadd.f32 %v103, %v352
  %v354 = vpop.f32.mrf.mxu0
  %v355 = vpop.f32.mrf.mxu0
  %v356 = vadd.f32 %v103, %v355
  %v357 = vpop.f32.mrf.mxu0
  %358 = vmatprep.mubr.bf16.mxu0 0
  %359 = vmatmul.mubr.bf16.gmra.mxu0 %v170
  %v360 = vpop.f32.mrf.mxu0
  %v361 = vadd.f32 %v103, %v360
  %v362 = vpop.f32.mrf.mxu0
  %v363 = vpop.f32.mrf.mxu0
  %v364 = vadd.f32 %v103, %v363
  %v365 = vpop.f32.mrf.mxu0
  %366 = vmatprep.mubr.bf16.mxu0 0
  %367 = vmatmul.mubr.bf16.gmra.mxu0 %v173
  %v368 = vpop.f32.mrf.mxu0
  %v369 = vadd.f32 %v103, %v368
  %v370 = vpop.f32.mrf.mxu0
  %v371 = vpop.f32.mrf.mxu0
  %v372 = vadd.f32 %v103, %v371
  %v373 = vpop.f32.mrf.mxu0
  %374 = vmatprep.mubr.bf16.mxu0 0
  %375 = vmatmul.mubr.bf16.gmra.mxu0 %v176
  %v376 = vpop.f32.mrf.mxu0
  %v377 = vadd.f32 %v103, %v376
  %v378 = vpop.f32.mrf.mxu0
  %v379 = vpop.f32.mrf.mxu0
  %v380 = vadd.f32 %v103, %v379
  %v381 = vpop.f32.mrf.mxu0
  %382 = vmatprep.mubr.bf16.mxu0 0
  %383 = vmatmul.mubr.bf16.gmra.mxu0 %v179
  %v384 = vpop.f32.mrf.mxu0
  %v385 = vadd.f32 %v103, %v384
  %v386 = vpop.f32.mrf.mxu0
  %v387 = vpop.f32.mrf.mxu0
  %v388 = vadd.f32 %v103, %v387
  %v389 = vpop.f32.mrf.mxu0
  %390 = vmatprep.mubr.bf16.mxu0 0
  %391 = vmatmul.mubr.bf16.gmra.mxu0 %v182
  %v392 = vpop.f32.mrf.mxu0
  %v393 = vadd.f32 %v103, %v392
  %v394 = vpop.f32.mrf.mxu0
  %v395 = vpop.f32.mrf.mxu0
  %v396 = vadd.f32 %v103, %v395
  %v397 = vpop.f32.mrf.mxu0
  %398 = vmatprep.mubr.bf16.mxu0 0
  %399 = vmatmul.mubr.bf16.gmra.mxu0 %v185
  %v400 = vpop.f32.mrf.mxu0
  %v401 = vadd.f32 %v103, %v400
  %v402 = vpop.f32.mrf.mxu0
  %v403 = vpop.f32.mrf.mxu0
  %v404 = vadd.f32 %v103, %v403
  %v405 = vpop.f32.mrf.mxu0
  %406 = vmatprep.mubr.bf16.mxu0 0
  %407 = vmatmul.mubr.bf16.gmra.mxu0 %v188
  %v408 = vpop.f32.mrf.mxu0
  %v409 = vadd.f32 %v103, %v408
  %v410 = vpop.f32.mrf.mxu0
  %v411 = vpop.f32.mrf.mxu0
  %v412 = vadd.f32 %v103, %v411
  %v413 = vpop.f32.mrf.mxu0
  %414 = vdwg.mxu0
  %v415 = vmax.f32 %v225, 0.0
  %v416 = vmax.f32 %v228, 0.0
  %v417 = vmax.f32 %v233, 0.0
  %v418 = vmax.f32 %v236, 0.0
  %v419 = vmax.f32 %v241, 0.0
  %v420 = vmax.f32 %v244, 0.0
  %v421 = vmax.f32 %v249, 0.0
  %v422 = vmax.f32 %v252, 0.0
  %v423 = vmax.f32 %v257, 0.0
  %v424 = vmax.f32 %v260, 0.0
  %v425 = vmax.f32 %v265, 0.0
  %v426 = vmax.f32 %v268, 0.0
  %v427 = vmax.f32 %v273, 0.0
  %v428 = vmax.f32 %v276, 0.0
  %v429 = vmax.f32 %v281, 0.0
  %v430 = vmax.f32 %v284, 0.0
  %v431 = vmax.f32 %v289, 0.0
  %v432 = vmax.f32 %v292, 0.0
  %v433 = vmax.f32 %v297, 0.0
  %v434 = vmax.f32 %v300, 0.0
  %v435 = vmax.f32 %v305, 0.0
  %v436 = vmax.f32 %v308, 0.0
  %v437 = vmax.f32 %v313, 0.0
  %v438 = vmax.f32 %v316, 0.0
  %v439 = vmax.f32 %v321, 0.0
  %v440 = vmax.f32 %v324, 0.0
  %v441 = vmax.f32 %v329, 0.0
  %v442 = vmax.f32 %v332, 0.0
  %v443 = vmax.f32 %v337, 0.0
  %v444 = vmax.f32 %v340, 0.0
  %v445 = vmax.f32 %v345, 0.0
  %v446 = vmax.f32 %v348, 0.0
  %v447 = vmax.f32 %v353, 0.0
  %v448 = vmax.f32 %v356, 0.0
  %v449 = vmax.f32 %v361, 0.0
  %v450 = vmax.f32 %v364, 0.0
  %v451 = vmax.f32 %v369, 0.0
  %v452 = vmax.f32 %v372, 0.0
  %v453 = vmax.f32 %v377, 0.0
  %v454 = vmax.f32 %v380, 0.0
  %v455 = vmax.f32 %v385, 0.0
  %v456 = vmax.f32 %v388, 0.0
  %v457 = vmax.f32 %v393, 0.0
  %v458 = vmax.f32 %v396, 0.0
  %v459 = vmax.f32 %v401, 0.0
  %v460 = vmax.f32 %v404, 0.0
  %v461 = vmax.f32 %v409, 0.0
  %v462 = vmax.f32 %v412, 0.0
  %v463 = vld [vmem:[%s3] sm:$0xff]
  %v464 = vld [vmem:[%s3 + $0x8] sm:$0xff]
  %v465 = vld [vmem:[%s3 + $0x10] sm:$0xff]
  %v466 = vld [vmem:[%s3 + $0x18] sm:$0xff]
  %v467 = vld [vmem:[%s3 + $0x20] sm:$0xff]
  %v468 = vld [vmem:[%s3 + $0x28] sm:$0xff]
  %v469 = vld [vmem:[%s3 + $0x30] sm:$0xff]
  %v470 = vld [vmem:[%s3 + $0x38] sm:$0xff]
  %v471 = vld [vmem:[%s3 + $0x40] sm:$0xff]
  %v472 = vld [vmem:[%s3 + $0x48] sm:$0xff]
  %v473 = vld [vmem:[%s3 + $0x50] sm:$0xff]
  %v474 = vld [vmem:[%s3 + $0x58] sm:$0xff]
  %v475 = vld [vmem:[%s3 + $0x60] sm:$0xff]
  %v476 = vld [vmem:[%s3 + $0x68] sm:$0xff]
  %v477 = vld [vmem:[%s3 + $0x70] sm:$0xff]
  %v478 = vld [vmem:[%s3 + $0x78] sm:$0xff]
  %479 = vmatprep.subr.mxu0 0.0
  %480 = vmatpush1.msra.mxu0 %v478
  %481 = vmatprep.subr.mxu0 0.0
  %482 = vmatpush1.msra.mxu0 %v477
  %483 = vmatprep.subr.mxu0 0.0
  %484 = vmatpush1.msra.mxu0 %v476
  %485 = vmatprep.subr.mxu0 0.0
  %486 = vmatpush1.msra.mxu0 %v475
  %487 = vmatprep.subr.mxu0 0.0
  %488 = vmatpush1.msra.mxu0 %v474
  %489 = vmatprep.subr.mxu0 0.0
  %490 = vmatpush1.msra.mxu0 %v473
  %491 = vmatprep.subr.mxu0 0.0
  %492 = vmatpush1.msra.mxu0 %v472
  %493 = vmatprep.subr.mxu0 0.0
  %494 = vmatpush1.msra.mxu0 %v471
  %495 = vmatprep.subr.mxu0 0.0
  %496 = vmatpush1.msra.mxu0 %v470
  %497 = vmatprep.subr.mxu0 0.0
  %498 = vmatpush1.msra.mxu0 %v469
  %499 = vmatprep.subr.mxu0 0.0
  %500 = vmatpush1.msra.mxu0 %v468
  %501 = vmatprep.subr.mxu0 0.0
  %502 = vmatpush1.msra.mxu0 %v467
  %503 = vmatprep.subr.mxu0 0.0
  %504 = vmatpush1.msra.mxu0 %v466
  %505 = vmatprep.subr.mxu0 0.0
  %506 = vmatpush1.msra.mxu0 %v465
  %507 = vmatprep.subr.mxu0 0.0
  %508 = vmatpush1.msra.mxu0 %v464
  %509 = vmatprep.subr.mxu0 0.0
  %510 = vmatpush1.msra.mxu0 %v463
  %511 = vmatprep.subr.mxu0 0.0
  %512 = vmatpush2.msra.mxu0 0.0
  %513 = vmatprep.subr.mxu0 0.0
  %514 = vmatpush2.msra.mxu0 0.0
  %515 = vmatprep.subr.mxu0 0.0
  %516 = vmatpush2.msra.mxu0 0.0
  %517 = vmatprep.subr.mxu0 0.0
  %518 = vmatpush2.msra.mxu0 0.0
  %519 = vmatprep.subr.mxu0 0.0
  %520 = vmatpush2.msra.mxu0 0.0
  %521 = vmatprep.subr.mxu0 0.0
  %522 = vmatpush2.msra.mxu0 0.0
  %523 = vmatprep.subr.mxu0 0.0
  %524 = vmatpush2.msra.mxu0 0.0
  %525 = vmatprep.subr.mxu0 0.0
  %526 = vmatpush2.msra.mxu0 0.0
  %527 = vmatprep.subr.mxu0 0.0
  %528 = vmatpush2.msra.mxu0 0.0
  %529 = vmatprep.subr.mxu0 0.0
  %530 = vmatpush2.msra.mxu0 0.0
  %531 = vmatprep.subr.mxu0 0.0
  %532 = vmatpush2.msra.mxu0 0.0
  %533 = vmatprep.subr.mxu0 0.0
  %534 = vmatpush2.msra.mxu0 0.0
  %535 = vmatprep.subr.mxu0 0.0
  %536 = vmatpush2.msra.mxu0 0.0
  %537 = vmatprep.subr.mxu0 0.0
  %538 = vmatpush2.msra.mxu0 0.0
  %539 = vmatprep.subr.mxu0 0.0
  %540 = vmatpush2.msra.mxu0 0.0
  %541 = vmatprep.subr.mxu0 0.0
  %542 = vmatpush2.msra.mxu0 0.0
  %543 = vmatprep.mubr.f32.mxu0 0.0
  %544 = vmatmul.mubr.f32.gmra.mxu0 %v415
  %v545 = vpop.f32.mrf.mxu0
  %v546 = vadd.f32 0.0, %v545
  %v547 = vpop.f32.mrf.mxu0
  %548 = vmatprep.mubr.f32.mxu0 0.0
  %549 = vmatmul.mubr.f32.gmra.mxu0 %v416
  %v550 = vpop.f32.mrf.mxu0
  %v551 = vadd.f32 0.0, %v550
  %v552 = vpop.f32.mrf.mxu0
  %553 = vmatprep.mubr.f32.mxu0 0.0
  %554 = vmatmul.mubr.f32.gmra.mxu0 %v417
  %v555 = vpop.f32.mrf.mxu0
  %v556 = vadd.f32 0.0, %v555
  %v557 = vpop.f32.mrf.mxu0
  %558 = vmatprep.mubr.f32.mxu0 0.0
  %559 = vmatmul.mubr.f32.gmra.mxu0 %v418
  %v560 = vpop.f32.mrf.mxu0
  %v561 = vadd.f32 0.0, %v560
  %v562 = vpop.f32.mrf.mxu0
  %563 = vmatprep.mubr.f32.mxu0 0.0
  %564 = vmatmul.mubr.f32.gmra.mxu0 %v419
  %v565 = vpop.f32.mrf.mxu0
  %v566 = vadd.f32 0.0, %v565
  %v567 = vpop.f32.mrf.mxu0
  %568 = vmatprep.mubr.f32.mxu0 0.0
  %569 = vmatmul.mubr.f32.gmra.mxu0 %v420
  %v570 = vpop.f32.mrf.mxu0
  %v571 = vadd.f32 0.0, %v570
  %v572 = vpop.f32.mrf.mxu0
  %573 = vmatprep.mubr.f32.mxu0 0.0
  %574 = vmatmul.mubr.f32.gmra.mxu0 %v421
  %v575 = vpop.f32.mrf.mxu0
  %v576 = vadd.f32 0.0, %v575
  %v577 = vpop.f32.mrf.mxu0
  %578 = vmatprep.mubr.f32.mxu0 0.0
  %579 = vmatmul.mubr.f32.gmra.mxu0 %v422
  %v580 = vpop.f32.mrf.mxu0
  %v581 = vadd.f32 0.0, %v580
  %v582 = vpop.f32.mrf.mxu0
  %583 = vmatprep.mubr.f32.mxu0 0.0
  %584 = vmatmul.mubr.f32.gmra.mxu0 %v423
  %v585 = vpop.f32.mrf.mxu0
  %v586 = vadd.f32 0.0, %v585
  %v587 = vpop.f32.mrf.mxu0
  %588 = vmatprep.mubr.f32.mxu0 0.0
  %589 = vmatmul.mubr.f32.gmra.mxu0 %v424
  %v590 = vpop.f32.mrf.mxu0
  %v591 = vadd.f32 0.0, %v590
  %v592 = vpop.f32.mrf.mxu0
  %593 = vmatprep.mubr.f32.mxu0 0.0
  %594 = vmatmul.mubr.f32.gmra.mxu0 %v425
  %v595 = vpop.f32.mrf.mxu0
  %v596 = vadd.f32 0.0, %v595
  %v597 = vpop.f32.mrf.mxu0
  %598 = vmatprep.mubr.f32.mxu0 0.0
  %599 = vmatmul.mubr.f32.gmra.mxu0 %v426
  %v600 = vpop.f32.mrf.mxu0
  %v601 = vadd.f32 0.0, %v600
  %v602 = vpop.f32.mrf.mxu0
  %603 = vmatprep.mubr.f32.mxu0 0.0
  %604 = vmatmul.mubr.f32.gmra.mxu0 %v427
  %v605 = vpop.f32.mrf.mxu0
  %v606 = vadd.f32 0.0, %v605
  %v607 = vpop.f32.mrf.mxu0
  %608 = vmatprep.mubr.f32.mxu0 0.0
  %609 = vmatmul.mubr.f32.gmra.mxu0 %v428
  %v610 = vpop.f32.mrf.mxu0
  %v611 = vadd.f32 0.0, %v610
  %v612 = vpop.f32.mrf.mxu0
  %613 = vmatprep.mubr.f32.mxu0 0.0
  %614 = vmatmul.mubr.f32.gmra.mxu0 %v429
  %v615 = vpop.f32.mrf.mxu0
  %v616 = vadd.f32 0.0, %v615
  %v617 = vpop.f32.mrf.mxu0
  %618 = vmatprep.mubr.f32.mxu0 0.0
  %619 = vmatmul.mubr.f32.gmra.mxu0 %v430
  %v620 = vpop.f32.mrf.mxu0
  %v621 = vadd.f32 0.0, %v620
  %v622 = vpop.f32.mrf.mxu0
  %623 = vmatprep.mubr.f32.mxu0 0.0
  %624 = vmatmul.mubr.f32.gmra.mxu0 %v431
  %v625 = vpop.f32.mrf.mxu0
  %v626 = vadd.f32 0.0, %v625
  %v627 = vpop.f32.mrf.mxu0
  %628 = vmatprep.mubr.f32.mxu0 0.0
  %629 = vmatmul.mubr.f32.gmra.mxu0 %v432
  %v630 = vpop.f32.mrf.mxu0
  %v631 = vadd.f32 0.0, %v630
  %v632 = vpop.f32.mrf.mxu0
  %633 = vmatprep.mubr.f32.mxu0 0.0
  %634 = vmatmul.mubr.f32.gmra.mxu0 %v433
  %v635 = vpop.f32.mrf.mxu0
  %v636 = vadd.f32 0.0, %v635
  %v637 = vpop.f32.mrf.mxu0
  %638 = vmatprep.mubr.f32.mxu0 0.0
  %639 = vmatmul.mubr.f32.gmra.mxu0 %v434
  %v640 = vpop.f32.mrf.mxu0
  %v641 = vadd.f32 0.0, %v640
  %v642 = vpop.f32.mrf.mxu0
  %643 = vmatprep.mubr.f32.mxu0 0.0
  %644 = vmatmul.mubr.f32.gmra.mxu0 %v435
  %v645 = vpop.f32.mrf.mxu0
  %v646 = vadd.f32 0.0, %v645
  %v647 = vpop.f32.mrf.mxu0
  %648 = vmatprep.mubr.f32.mxu0 0.0
  %649 = vmatmul.mubr.f32.gmra.mxu0 %v436
  %v650 = vpop.f32.mrf.mxu0
  %v651 = vadd.f32 0.0, %v650
  %v652 = vpop.f32.mrf.mxu0
  %653 = vmatprep.mubr.f32.mxu0 0.0
  %654 = vmatmul.mubr.f32.gmra.mxu0 %v437
  %v655 = vpop.f32.mrf.mxu0
  %v656 = vadd.f32 0.0, %v655
  %v657 = vpop.f32.mrf.mxu0
  %658 = vmatprep.mubr.f32.mxu0 0.0
  %659 = vmatmul.mubr.f32.gmra.mxu0 %v438
  %v660 = vpop.f32.mrf.mxu0
  %v661 = vadd.f32 0.0, %v660
  %v662 = vpop.f32.mrf.mxu0
  %663 = vmatprep.mubr.f32.mxu0 0.0
  %664 = vmatmul.mubr.f32.gmra.mxu0 %v439
  %v665 = vpop.f32.mrf.mxu0
  %v666 = vadd.f32 0.0, %v665
  %v667 = vpop.f32.mrf.mxu0
  %668 = vmatprep.mubr.f32.mxu0 0.0
  %669 = vmatmul.mubr.f32.gmra.mxu0 %v440
  %v670 = vpop.f32.mrf.mxu0
  %v671 = vadd.f32 0.0, %v670
  %v672 = vpop.f32.mrf.mxu0
  %673 = vmatprep.mubr.f32.mxu0 0.0
  %674 = vmatmul.mubr.f32.gmra.mxu0 %v441
  %v675 = vpop.f32.mrf.mxu0
  %v676 = vadd.f32 0.0, %v675
  %v677 = vpop.f32.mrf.mxu0
  %678 = vmatprep.mubr.f32.mxu0 0.0
  %679 = vmatmul.mubr.f32.gmra.mxu0 %v442
  %v680 = vpop.f32.mrf.mxu0
  %v681 = vadd.f32 0.0, %v680
  %v682 = vpop.f32.mrf.mxu0
  %683 = vmatprep.mubr.f32.mxu0 0.0
  %684 = vmatmul.mubr.f32.gmra.mxu0 %v443
  %v685 = vpop.f32.mrf.mxu0
  %v686 = vadd.f32 0.0, %v685
  %v687 = vpop.f32.mrf.mxu0
  %688 = vmatprep.mubr.f32.mxu0 0.0
  %689 = vmatmul.mubr.f32.gmra.mxu0 %v444
  %v690 = vpop.f32.mrf.mxu0
  %v691 = vadd.f32 0.0, %v690
  %v692 = vpop.f32.mrf.mxu0
  %693 = vmatprep.mubr.f32.mxu0 0.0
  %694 = vmatmul.mubr.f32.gmra.mxu0 %v445
  %v695 = vpop.f32.mrf.mxu0
  %v696 = vadd.f32 0.0, %v695
  %v697 = vpop.f32.mrf.mxu0
  %698 = vmatprep.mubr.f32.mxu0 0.0
  %699 = vmatmul.mubr.f32.gmra.mxu0 %v446
  %v700 = vpop.f32.mrf.mxu0
  %v701 = vadd.f32 0.0, %v700
  %v702 = vpop.f32.mrf.mxu0
  %703 = vmatprep.mubr.f32.mxu0 0.0
  %704 = vmatmul.mubr.f32.gmra.mxu0 %v447
  %v705 = vpop.f32.mrf.mxu0
  %v706 = vadd.f32 0.0, %v705
  %v707 = vpop.f32.mrf.mxu0
  %708 = vmatprep.mubr.f32.mxu0 0.0
  %709 = vmatmul.mubr.f32.gmra.mxu0 %v448
  %v710 = vpop.f32.mrf.mxu0
  %v711 = vadd.f32 0.0, %v710
  %v712 = vpop.f32.mrf.mxu0
  %713 = vmatprep.mubr.f32.mxu0 0.0
  %714 = vmatmul.mubr.f32.gmra.mxu0 %v449
  %v715 = vpop.f32.mrf.mxu0
  %v716 = vadd.f32 0.0, %v715
  %v717 = vpop.f32.mrf.mxu0
  %718 = vmatprep.mubr.f32.mxu0 0.0
  %719 = vmatmul.mubr.f32.gmra.mxu0 %v450
  %v720 = vpop.f32.mrf.mxu0
  %v721 = vadd.f32 0.0, %v720
  %v722 = vpop.f32.mrf.mxu0
  %723 = vmatprep.mubr.f32.mxu0 0.0
  %724 = vmatmul.mubr.f32.gmra.mxu0 %v451
  %v725 = vpop.f32.mrf.mxu0
  %v726 = vadd.f32 0.0, %v725
  %v727 = vpop.f32.mrf.mxu0
  %728 = vmatprep.mubr.f32.mxu0 0.0
  %729 = vmatmul.mubr.f32.gmra.mxu0 %v452
  %v730 = vpop.f32.mrf.mxu0
  %v731 = vadd.f32 0.0, %v730
  %v732 = vpop.f32.mrf.mxu0
  %733 = vmatprep.mubr.f32.mxu0 0.0
  %734 = vmatmul.mubr.f32.gmra.mxu0 %v453
  %v735 = vpop.f32.mrf.mxu0
  %v736 = vadd.f32 0.0, %v735
  %v737 = vpop.f32.mrf.mxu0
  %738 = vmatprep.mubr.f32.mxu0 0.0
  %739 = vmatmul.mubr.f32.gmra.mxu0 %v454
  %v740 = vpop.f32.mrf.mxu0
  %v741 = vadd.f32 0.0, %v740
  %v742 = vpop.f32.mrf.mxu0
  %743 = vmatprep.mubr.f32.mxu0 0.0
  %744 = vmatmul.mubr.f32.gmra.mxu0 %v455
  %v745 = vpop.f32.mrf.mxu0
  %v746 = vadd.f32 0.0, %v745
  %v747 = vpop.f32.mrf.mxu0
  %748 = vmatprep.mubr.f32.mxu0 0.0
  %749 = vmatmul.mubr.f32.gmra.mxu0 %v456
  %v750 = vpop.f32.mrf.mxu0
  %v751 = vadd.f32 0.0, %v750
  %v752 = vpop.f32.mrf.mxu0
  %753 = vmatprep.mubr.f32.mxu0 0.0
  %754 = vmatmul.mubr.f32.gmra.mxu0 %v457
  %v755 = vpop.f32.mrf.mxu0
  %v756 = vadd.f32 0.0, %v755
  %v757 = vpop.f32.mrf.mxu0
  %758 = vmatprep.mubr.f32.mxu0 0.0
  %759 = vmatmul.mubr.f32.gmra.mxu0 %v458
  %v760 = vpop.f32.mrf.mxu0
  %v761 = vadd.f32 0.0, %v760
  %v762 = vpop.f32.mrf.mxu0
  %763 = vmatprep.mubr.f32.mxu0 0.0
  %764 = vmatmul.mubr.f32.gmra.mxu0 %v459
  %v765 = vpop.f32.mrf.mxu0
  %v766 = vadd.f32 0.0, %v765
  %v767 = vpop.f32.mrf.mxu0
  %768 = vmatprep.mubr.f32.mxu0 0.0
  %769 = vmatmul.mubr.f32.gmra.mxu0 %v460
  %v770 = vpop.f32.mrf.mxu0
  %v771 = vadd.f32 0.0, %v770
  %v772 = vpop.f32.mrf.mxu0
  %773 = vmatprep.mubr.f32.mxu0 0.0
  %774 = vmatmul.mubr.f32.gmra.mxu0 %v461
  %v775 = vpop.f32.mrf.mxu0
  %v776 = vadd.f32 0.0, %v775
  %v777 = vpop.f32.mrf.mxu0
  %778 = vmatprep.mubr.f32.mxu0 0.0
  %779 = vmatmul.mubr.f32.gmra.mxu0 %v462
  %v780 = vpop.f32.mrf.mxu0
  %v781 = vadd.f32 0.0, %v780
  %v782 = vpop.f32.mrf.mxu0
  %783 = vdwg.mxu0
  %s784 = sld [smem:[#allocation2]]
  %v785 = vstv %s784
  %v786 = vadd.f32 %v546, %v785
  %v787 = vadd.f32 %v551, %v785
  %v788 = vadd.f32 %v556, %v785
  %v789 = vadd.f32 %v561, %v785
  %v790 = vadd.f32 %v566, %v785
  %v791 = vadd.f32 %v571, %v785
  %v792 = vadd.f32 %v576, %v785
  %v793 = vadd.f32 %v581, %v785
  %v794 = vadd.f32 %v586, %v785
  %v795 = vadd.f32 %v591, %v785
  %v796 = vadd.f32 %v596, %v785
  %v797 = vadd.f32 %v601, %v785
  %v798 = vadd.f32 %v606, %v785
  %v799 = vadd.f32 %v611, %v785
  %v800 = vadd.f32 %v616, %v785
  %v801 = vadd.f32 %v621, %v785
  %v802 = vadd.f32 %v626, %v785
  %v803 = vadd.f32 %v631, %v785
  %v804 = vadd.f32 %v636, %v785
  %v805 = vadd.f32 %v641, %v785
  %v806 = vadd.f32 %v646, %v785
  %v807 = vadd.f32 %v651, %v785
  %v808 = vadd.f32 %v656, %v785
  %v809 = vadd.f32 %v661, %v785
  %v810 = vadd.f32 %v666, %v785
  %v811 = vadd.f32 %v671, %v785
  %v812 = vadd.f32 %v676, %v785
  %v813 = vadd.f32 %v681, %v785
  %v814 = vadd.f32 %v686, %v785
  %v815 = vadd.f32 %v691, %v785
  %v816 = vadd.f32 %v696, %v785
  %v817 = vadd.f32 %v701, %v785
  %v818 = vadd.f32 %v706, %v785
  %v819 = vadd.f32 %v711, %v785
  %v820 = vadd.f32 %v716, %v785
  %v821 = vadd.f32 %v721, %v785
  %v822 = vadd.f32 %v726, %v785
  %v823 = vadd.f32 %v731, %v785
  %v824 = vadd.f32 %v736, %v785
  %v825 = vadd.f32 %v741, %v785
  %v826 = vadd.f32 %v746, %v785
  %v827 = vadd.f32 %v751, %v785
  %v828 = vadd.f32 %v756, %v785
  %v829 = vadd.f32 %v761, %v785
  %v830 = vadd.f32 %v766, %v785
  %v831 = vadd.f32 %v771, %v785
  %v832 = vadd.f32 %v776, %v785
  %v833 = vadd.f32 %v781, %v785
  %v834 = vxor.u32 %v786, 2147483648
  %v835 = vxor.u32 %v787, 2147483648
  %v836 = vxor.u32 %v788, 2147483648
  %v837 = vxor.u32 %v789, 2147483648
  %v838 = vxor.u32 %v790, 2147483648
  %v839 = vxor.u32 %v791, 2147483648
  %v840 = vxor.u32 %v792, 2147483648
  %v841 = vxor.u32 %v793, 2147483648
  %v842 = vxor.u32 %v794, 2147483648
  %v843 = vxor.u32 %v795, 2147483648
  %v844 = vxor.u32 %v796, 2147483648
  %v845 = vxor.u32 %v797, 2147483648
  %v846 = vxor.u32 %v798, 2147483648
  %v847 = vxor.u32 %v799, 2147483648
  %v848 = vxor.u32 %v800, 2147483648
  %v849 = vxor.u32 %v801, 2147483648
  %v850 = vxor.u32 %v802, 2147483648
  %v851 = vxor.u32 %v803, 2147483648
  %v852 = vxor.u32 %v804, 2147483648
  %v853 = vxor.u32 %v805, 2147483648
  %v854 = vxor.u32 %v806, 2147483648
  %v855 = vxor.u32 %v807, 2147483648
  %v856 = vxor.u32 %v808, 2147483648
  %v857 = vxor.u32 %v809, 2147483648
  %v858 = vxor.u32 %v810, 2147483648
  %v859 = vxor.u32 %v811, 2147483648
  %v860 = vxor.u32 %v812, 2147483648
  %v861 = vxor.u32 %v813, 2147483648
  %v862 = vxor.u32 %v814, 2147483648
  %v863 = vxor.u32 %v815, 2147483648
  %v864 = vxor.u32 %v816, 2147483648
  %v865 = vxor.u32 %v817, 2147483648
  %v866 = vxor.u32 %v818, 2147483648
  %v867 = vxor.u32 %v819, 2147483648
  %v868 = vxor.u32 %v820, 2147483648
  %v869 = vxor.u32 %v821, 2147483648
  %v870 = vxor.u32 %v822, 2147483648
  %v871 = vxor.u32 %v823, 2147483648
  %v872 = vxor.u32 %v824, 2147483648
  %v873 = vxor.u32 %v825, 2147483648
  %v874 = vxor.u32 %v826, 2147483648
  %v875 = vxor.u32 %v827, 2147483648
  %v876 = vxor.u32 %v828, 2147483648
  %v877 = vxor.u32 %v829, 2147483648
  %v878 = vxor.u32 %v830, 2147483648
  %v879 = vxor.u32 %v831, 2147483648
  %v880 = vxor.u32 %v832, 2147483648
  %v881 = vxor.u32 %v833, 2147483648
  %v882 = vmul.f32 %v834, 1.442695
  %v883 = vpow.pop %v882
  %v884 = vmul.f32 %v835, 1.442695
  %v885 = vpow.pop %v884
  %v886 = vmul.f32 %v836, 1.442695
  %v887 = vpow.pop %v886
  %v888 = vmul.f32 %v837, 1.442695
  %v889 = vpow.pop %v888
  %v890 = vmul.f32 %v838, 1.442695
  %v891 = vpow.pop %v890
  %v892 = vmul.f32 %v839, 1.442695
  %v893 = vpow.pop %v892
  %v894 = vmul.f32 %v840, 1.442695
  %v895 = vpow.pop %v894
  %v896 = vmul.f32 %v841, 1.442695
  %v897 = vpow.pop %v896
  %v898 = vmul.f32 %v842, 1.442695
  %v899 = vpow.pop %v898
  %v900 = vmul.f32 %v843, 1.442695
  %v901 = vpow.pop %v900
  %v902 = vmul.f32 %v844, 1.442695
  %v903 = vpow.pop %v902
  %v904 = vmul.f32 %v845, 1.442695
  %v905 = vpow.pop %v904
  %v906 = vmul.f32 %v846, 1.442695
  %v907 = vpow.pop %v906
  %v908 = vmul.f32 %v847, 1.442695
  %v909 = vpow.pop %v908
  %v910 = vmul.f32 %v848, 1.442695
  %v911 = vpow.pop %v910
  %v912 = vmul.f32 %v849, 1.442695
  %v913 = vpow.pop %v912
  %v914 = vmul.f32 %v850, 1.442695
  %v915 = vpow.pop %v914
  %v916 = vmul.f32 %v851, 1.442695
  %v917 = vpow.pop %v916
  %v918 = vmul.f32 %v852, 1.442695
  %v919 = vpow.pop %v918
  %v920 = vmul.f32 %v853, 1.442695
  %v921 = vpow.pop %v920
  %v922 = vmul.f32 %v854, 1.442695
  %v923 = vpow.pop %v922
  %v924 = vmul.f32 %v855, 1.442695
  %v925 = vpow.pop %v924
  %v926 = vmul.f32 %v856, 1.442695
  %v927 = vpow.pop %v926
  %v928 = vmul.f32 %v857, 1.442695
  %v929 = vpow.pop %v928
  %v930 = vmul.f32 %v858, 1.442695
  %v931 = vpow.pop %v930
  %v932 = vmul.f32 %v859, 1.442695
  %v933 = vpow.pop %v932
  %v934 = vmul.f32 %v860, 1.442695
  %v935 = vpow.pop %v934
  %v936 = vmul.f32 %v861, 1.442695
  %v937 = vpow.pop %v936
  %v938 = vmul.f32 %v862, 1.442695
  %v939 = vpow.pop %v938
  %v940 = vmul.f32 %v863, 1.442695
  %v941 = vpow.pop %v940
  %v942 = vmul.f32 %v864, 1.442695
  %v943 = vpow.pop %v942
  %v944 = vmul.f32 %v865, 1.442695
  %v945 = vpow.pop %v944
  %v946 = vmul.f32 %v866, 1.442695
  %v947 = vpow.pop %v946
  %v948 = vmul.f32 %v867, 1.442695
  %v949 = vpow.pop %v948
  %v950 = vmul.f32 %v868, 1.442695
  %v951 = vpow.pop %v950
  %v952 = vmul.f32 %v869, 1.442695
  %v953 = vpow.pop %v952
  %v954 = vmul.f32 %v870, 1.442695
  %v955 = vpow.pop %v954
  %v956 = vmul.f32 %v871, 1.442695
  %v957 = vpow.pop %v956
  %v958 = vmul.f32 %v872, 1.442695
  %v959 = vpow.pop %v958
  %v960 = vmul.f32 %v873, 1.442695
  %v961 = vpow.pop %v960
  %v962 = vmul.f32 %v874, 1.442695
  %v963 = vpow.pop %v962
  %v964 = vmul.f32 %v875, 1.442695
  %v965 = vpow.pop %v964
  %v966 = vmul.f32 %v876, 1.442695
  %v967 = vpow.pop %v966
  %v968 = vmul.f32 %v877, 1.442695
  %v969 = vpow.pop %v968
  %v970 = vmul.f32 %v878, 1.442695
  %v971 = vpow.pop %v970
  %v972 = vmul.f32 %v879, 1.442695
  %v973 = vpow.pop %v972
  %v974 = vmul.f32 %v880, 1.442695
  %v975 = vpow.pop %v974
  %v976 = vmul.f32 %v881, 1.442695
  %v977 = vpow.pop %v976
  %v978 = vadd.f32 %v883, 1.0
  %v979 = vadd.f32 %v885, 1.0
  %v980 = vadd.f32 %v887, 1.0
  %v981 = vadd.f32 %v889, 1.0
  %v982 = vadd.f32 %v891, 1.0
  %v983 = vadd.f32 %v893, 1.0
  %v984 = vadd.f32 %v895, 1.0
  %v985 = vadd.f32 %v897, 1.0
  %v986 = vadd.f32 %v899, 1.0
  %v987 = vadd.f32 %v901, 1.0
  %v988 = vadd.f32 %v903, 1.0
  %v989 = vadd.f32 %v905, 1.0
  %v990 = vadd.f32 %v907, 1.0
  %v991 = vadd.f32 %v909, 1.0
  %v992 = vadd.f32 %v911, 1.0
  %v993 = vadd.f32 %v913, 1.0
  %v994 = vadd.f32 %v915, 1.0
  %v995 = vadd.f32 %v917, 1.0
  %v996 = vadd.f32 %v919, 1.0
  %v997 = vadd.f32 %v921, 1.0
  %v998 = vadd.f32 %v923, 1.0
  %v999 = vadd.f32 %v925, 1.0
  %v1000 = vadd.f32 %v927, 1.0
  %v1001 = vadd.f32 %v929, 1.0
  %v1002 = vadd.f32 %v931, 1.0
  %v1003 = vadd.f32 %v933, 1.0
  %v1004 = vadd.f32 %v935, 1.0
  %v1005 = vadd.f32 %v937, 1.0
  %v1006 = vadd.f32 %v939, 1.0
  %v1007 = vadd.f32 %v941, 1.0
  %v1008 = vadd.f32 %v943, 1.0
  %v1009 = vadd.f32 %v945, 1.0
  %v1010 = vadd.f32 %v947, 1.0
  %v1011 = vadd.f32 %v949, 1.0
  %v1012 = vadd.f32 %v951, 1.0
  %v1013 = vadd.f32 %v953, 1.0
  %v1014 = vadd.f32 %v955, 1.0
  %v1015 = vadd.f32 %v957, 1.0
  %v1016 = vadd.f32 %v959, 1.0
  %v1017 = vadd.f32 %v961, 1.0
  %v1018 = vadd.f32 %v963, 1.0
  %v1019 = vadd.f32 %v965, 1.0
  %v1020 = vadd.f32 %v967, 1.0
  %v1021 = vadd.f32 %v969, 1.0
  %v1022 = vadd.f32 %v971, 1.0
  %v1023 = vadd.f32 %v973, 1.0
  %v1024 = vadd.f32 %v975, 1.0
  %v1025 = vadd.f32 %v977, 1.0
  %v1026 = vrcp.pop %v978
  %v1027 = vmul.f32 1.0, %v1026
  %v1028 = vrcp.pop %v979
  %v1029 = vmul.f32 1.0, %v1028
  %v1030 = vrcp.pop %v980
  %v1031 = vmul.f32 1.0, %v1030
  %v1032 = vrcp.pop %v981
  %v1033 = vmul.f32 1.0, %v1032
  %v1034 = vrcp.pop %v982
  %v1035 = vmul.f32 1.0, %v1034
  %v1036 = vrcp.pop %v983
  %v1037 = vmul.f32 1.0, %v1036
  %v1038 = vrcp.pop %v984
  %v1039 = vmul.f32 1.0, %v1038
  %v1040 = vrcp.pop %v985
  %v1041 = vmul.f32 1.0, %v1040
  %v1042 = vrcp.pop %v986
  %v1043 = vmul.f32 1.0, %v1042
  %v1044 = vrcp.pop %v987
  %v1045 = vmul.f32 1.0, %v1044
  %v1046 = vrcp.pop %v988
  %v1047 = vmul.f32 1.0, %v1046
  %v1048 = vrcp.pop %v989
  %v1049 = vmul.f32 1.0, %v1048
  %v1050 = vrcp.pop %v990
  %v1051 = vmul.f32 1.0, %v1050
  %v1052 = vrcp.pop %v991
  %v1053 = vmul.f32 1.0, %v1052
  %v1054 = vrcp.pop %v992
  %v1055 = vmul.f32 1.0, %v1054
  %v1056 = vrcp.pop %v993
  %v1057 = vmul.f32 1.0, %v1056
  %v1058 = vrcp.pop %v994
  %v1059 = vmul.f32 1.0, %v1058
  %v1060 = vrcp.pop %v995
  %v1061 = vmul.f32 1.0, %v1060
  %v1062 = vrcp.pop %v996
  %v1063 = vmul.f32 1.0, %v1062
  %v1064 = vrcp.pop %v997
  %v1065 = vmul.f32 1.0, %v1064
  %v1066 = vrcp.pop %v998
  %v1067 = vmul.f32 1.0, %v1066
  %v1068 = vrcp.pop %v999
  %v1069 = vmul.f32 1.0, %v1068
  %v1070 = vrcp.pop %v1000
  %v1071 = vmul.f32 1.0, %v1070
  %v1072 = vrcp.pop %v1001
  %v1073 = vmul.f32 1.0, %v1072
  %v1074 = vrcp.pop %v1002
  %v1075 = vmul.f32 1.0, %v1074
  %v1076 = vrcp.pop %v1003
  %v1077 = vmul.f32 1.0, %v1076
  %v1078 = vrcp.pop %v1004
  %v1079 = vmul.f32 1.0, %v1078
  %v1080 = vrcp.pop %v1005
  %v1081 = vmul.f32 1.0, %v1080
  %v1082 = vrcp.pop %v1006
  %v1083 = vmul.f32 1.0, %v1082
  %v1084 = vrcp.pop %v1007
  %v1085 = vmul.f32 1.0, %v1084
  %v1086 = vrcp.pop %v1008
  %v1087 = vmul.f32 1.0, %v1086
  %v1088 = vrcp.pop %v1009
  %v1089 = vmul.f32 1.0, %v1088
  %v1090 = vrcp.pop %v1010
  %v1091 = vmul.f32 1.0, %v1090
  %v1092 = vrcp.pop %v1011
  %v1093 = vmul.f32 1.0, %v1092
  %v1094 = vrcp.pop %v1012
  %v1095 = vmul.f32 1.0, %v1094
  %v1096 = vrcp.pop %v1013
  %v1097 = vmul.f32 1.0, %v1096
  %v1098 = vrcp.pop %v1014
  %v1099 = vmul.f32 1.0, %v1098
  %v1100 = vrcp.pop %v1015
  %v1101 = vmul.f32 1.0, %v1100
  %v1102 = vrcp.pop %v1016
  %v1103 = vmul.f32 1.0, %v1102
  %v1104 = vrcp.pop %v1017
  %v1105 = vmul.f32 1.0, %v1104
  %v1106 = vrcp.pop %v1018
  %v1107 = vmul.f32 1.0, %v1106
  %v1108 = vrcp.pop %v1019
  %v1109 = vmul.f32 1.0, %v1108
  %v1110 = vrcp.pop %v1020
  %v1111 = vmul.f32 1.0, %v1110
  %v1112 = vrcp.pop %v1021
  %v1113 = vmul.f32 1.0, %v1112
  %v1114 = vrcp.pop %v1022
  %v1115 = vmul.f32 1.0, %v1114
  %v1116 = vrcp.pop %v1023
  %v1117 = vmul.f32 1.0, %v1116
  %v1118 = vrcp.pop %v1024
  %v1119 = vmul.f32 1.0, %v1118
  %v1120 = vrcp.pop %v1025
  %v1121 = vmul.f32 1.0, %v1120
  %vm1122 = vcmask 7168
  %1123 = vst.msk [vmem:[%s5] sm:$0xff] %vm1122, %v1027
  %1124 = vst.msk [vmem:[%s5 + $0x8] sm:$0xff] %vm1122, %v1029
  %1125 = vst.msk [vmem:[%s5 + $0x10] sm:$0xff] %vm1122, %v1031
  %1126 = vst.msk [vmem:[%s5 + $0x18] sm:$0xff] %vm1122, %v1033
  %1127 = vst.msk [vmem:[%s5 + $0x20] sm:$0xff] %vm1122, %v1035
  %1128 = vst.msk [vmem:[%s5 + $0x28] sm:$0xff] %vm1122, %v1037
  %1129 = vst.msk [vmem:[%s5 + $0x30] sm:$0xff] %vm1122, %v1039
  %1130 = vst.msk [vmem:[%s5 + $0x38] sm:$0xff] %vm1122, %v1041
  %1131 = vst.msk [vmem:[%s5 + $0x40] sm:$0xff] %vm1122, %v1043
  %1132 = vst.msk [vmem:[%s5 + $0x48] sm:$0xff] %vm1122, %v1045
  %1133 = vst.msk [vmem:[%s5 + $0x50] sm:$0xff] %vm1122, %v1047
  %1134 = vst.msk [vmem:[%s5 + $0x58] sm:$0xff] %vm1122, %v1049
  %1135 = vst.msk [vmem:[%s5 + $0x60] sm:$0xff] %vm1122, %v1051
  %1136 = vst.msk [vmem:[%s5 + $0x68] sm:$0xff] %vm1122, %v1053
  %1137 = vst.msk [vmem:[%s5 + $0x70] sm:$0xff] %vm1122, %v1055
  %1138 = vst.msk [vmem:[%s5 + $0x78] sm:$0xff] %vm1122, %v1057
  %1139 = vst.msk [vmem:[%s5 + $0x80] sm:$0xff] %vm1122, %v1059
  %1140 = vst.msk [vmem:[%s5 + $0x88] sm:$0xff] %vm1122, %v1061
  %1141 = vst.msk [vmem:[%s5 + $0x90] sm:$0xff] %vm1122, %v1063
  %1142 = vst.msk [vmem:[%s5 + $0x98] sm:$0xff] %vm1122, %v1065
  %1143 = vst.msk [vmem:[%s5 + $0xa0] sm:$0xff] %vm1122, %v1067
  %1144 = vst.msk [vmem:[%s5 + $0xa8] sm:$0xff] %vm1122, %v1069
  %1145 = vst.msk [vmem:[%s5 + $0xb0] sm:$0xff] %vm1122, %v1071
  %1146 = vst.msk [vmem:[%s5 + $0xb8] sm:$0xff] %vm1122, %v1073
  %1147 = vst.msk [vmem:[%s5 + $0xc0] sm:$0xff] %vm1122, %v1075
  %1148 = vst.msk [vmem:[%s5 + $0xc8] sm:$0xff] %vm1122, %v1077
  %1149 = vst.msk [vmem:[%s5 + $0xd0] sm:$0xff] %vm1122, %v1079
  %1150 = vst.msk [vmem:[%s5 + $0xd8] sm:$0xff] %vm1122, %v1081
  %1151 = vst.msk [vmem:[%s5 + $0xe0] sm:$0xff] %vm1122, %v1083
  %1152 = vst.msk [vmem:[%s5 + $0xe8] sm:$0xff] %vm1122, %v1085
  %1153 = vst.msk [vmem:[%s5 + $0xf0] sm:$0xff] %vm1122, %v1087
  %1154 = vst.msk [vmem:[%s5 + $0xf8] sm:$0xff] %vm1122, %v1089
  %1155 = vst.msk [vmem:[%s5 + $0x100] sm:$0xff] %vm1122, %v1091
  %1156 = vst.msk [vmem:[%s5 + $0x108] sm:$0xff] %vm1122, %v1093
  %1157 = vst.msk [vmem:[%s5 + $0x110] sm:$0xff] %vm1122, %v1095
  %1158 = vst.msk [vmem:[%s5 + $0x118] sm:$0xff] %vm1122, %v1097
  %1159 = vst.msk [vmem:[%s5 + $0x120] sm:$0xff] %vm1122, %v1099
  %1160 = vst.msk [vmem:[%s5 + $0x128] sm:$0xff] %vm1122, %v1101
  %1161 = vst.msk [vmem:[%s5 + $0x130] sm:$0xff] %vm1122, %v1103
  %1162 = vst.msk [vmem:[%s5 + $0x138] sm:$0xff] %vm1122, %v1105
  %1163 = vst.msk [vmem:[%s5 + $0x140] sm:$0xff] %vm1122, %v1107
  %1164 = vst.msk [vmem:[%s5 + $0x148] sm:$0xff] %vm1122, %v1109
  %1165 = vst.msk [vmem:[%s5 + $0x150] sm:$0xff] %vm1122, %v1111
  %1166 = vst.msk [vmem:[%s5 + $0x158] sm:$0xff] %vm1122, %v1113
  %1167 = vst.msk [vmem:[%s5 + $0x160] sm:$0xff] %vm1122, %v1115
  %1168 = vst.msk [vmem:[%s5 + $0x168] sm:$0xff] %vm1122, %v1117
  %1169 = vst.msk [vmem:[%s5 + $0x170] sm:$0xff] %vm1122, %v1119
  %1170 = vst.msk [vmem:[%s5 + $0x178] sm:$0xff] %vm1122, %v1121
  // Predicated region
  $region22: #{linear_model_apply.1} parent=0 // pred_check
    _
  $region23: #{linear_model_apply.1} parent=0 // pred_check_branch
    %1172 = sbr.rel (0) target = $region25
  $region24: #{linear_model_apply.1} parent=0 // pred_region
    _
  $region25: #{linear_model_apply.1} parent=0 // pred_fallthru
    _
  // Predicated region
  $region26: #{linear_model_apply.1} parent=0 // pred_check
    _
  $region27: #{linear_model_apply.1} parent=0 // pred_check_branch
    %1174 = sbr.rel (0) target = $region29
  $region28: #{linear_model_apply.1} parent=0 // pred_region
    _
  $region29: #{linear_model_apply.1} parent=0 // pred_fallthru
    _

</llo_original>
